<compile_context>
chip_gen: v7x
topology: tpu7x:2x2x1
jax: 0.10.0
libtpu: 0.0.40
codegen_flags: <defaults>
</compile_context>

<pallas_src>
import jax
import jax.numpy as jnp
from jax.experimental import pallas as pl
from jax.experimental.pallas import tpu as pltpu


# ------------------------------ helpers ------------------------------

def _round_up(v, m):
    return ((v + m - 1) // m) * m


def _tile_axis(size, target, granule):
    """Pad `size` and pick a tile so that tile % granule == 0 and padded % tile == 0.

    Keeps tiles balanced (padding waste < one granule per tile) instead of
    collapsing to a tiny divisor.
    Returns (padded_size, tile).
    """
    padded = _round_up(max(size, granule), granule)
    if padded <= target:
        return padded, padded
    n_tiles = -(-padded // target)
    tile = _round_up(-(-padded // n_tiles), granule)
    return n_tiles * tile, tile


# ------------------------------ kernel ------------------------------

def _fused_heads_kernel(x_ref, w_ref, b_ref, out_ref):
    # x: (tb, D)   w: (D, tn)   b: (1, tn)   out: (tb, tn)
    y = jnp.dot(x_ref[...], w_ref[...], preferred_element_type=jnp.float32)
    out_ref[...] = (y + b_ref[...]).astype(out_ref.dtype)


# ------------------------------ wrapper ------------------------------

def fused_heads(x, w_flat, b_flat, *, tn, block_b=512):
    """y = x @ W_flat + b over all heads at once.

    w_flat: (D, N_pad) already in the compute dtype, N_pad % tn == 0, padded
            columns are zero.
    b_flat: (1, N_pad) float32.
    Returns (B_pad, N_pad) float32; caller crops padding.
    """
    B, D = x.shape
    N_pad = w_flat.shape[1]
    assert N_pad % tn == 0

    itm_w = jnp.dtype(w_flat.dtype).itemsize
    # bf16 packs 16 rows per sublane group -> 16-row batch tiles; f32 -> 8.
    granule_b = 16 if itm_w == 2 else 8
    B_pad, tb = _tile_axis(B, block_b, granule_b)

    if B_pad != B:
        x = jnp.pad(x, ((0, B_pad - B), (0, 0)))
    if x.dtype != w_flat.dtype:
        x = x.astype(w_flat.dtype)          # activations only; weights pre-cast at init
    itm_x = jnp.dtype(x.dtype).itemsize

    n_j = N_pad // tn                       # weight/lane tiles (outer grid axis)
    n_i = B_pad // tb                       # batch tiles      (inner grid axis)
    grid = (n_j, n_i)                       # batch innermost -> W tile stays resident

    # Actual traffic: W + bias streamed once, x re-read once per N tile, out once.
    cost = pl.CostEstimate(
        flops=2 * B_pad * D * N_pad,
        transcendentals=0,
        bytes_accessed=(D * N_pad * itm_w) + (B_pad * D * itm_x) * n_j
                       + N_pad * 4 + B_pad * N_pad * 4,
    )

    # Double-buffered working set + margin, clamped to stay safe on v7x (64 MiB phys).
    vmem_needed = 2 * (tb * D * itm_x + D * tn * itm_w + tn * 4 + tb * tn * 4) + (2 << 20)
    vmem_limit = int(min(max(vmem_needed, 32 << 20), 48 << 20))

    return pl.pallas_call(
        _fused_heads_kernel,
        out_shape=jax.ShapeDtypeStruct((B_pad, N_pad), jnp.float32),
        grid=grid,
        in_specs=[
            pl.BlockSpec((tb, D), lambda j, i: (i, 0)),
            pl.BlockSpec((D, tn), lambda j, i: (0, j)),   # constant over inner (batch) loop
            pl.BlockSpec((1, tn), lambda j, i: (0, j)),
        ],
        out_specs=pl.BlockSpec((tb, tn), lambda j, i: (i, j)),
        compiler_params=pltpu.CompilerParams(
            dimension_semantics=("parallel", "parallel"),
            vmem_limit_bytes=vmem_limit),
        cost_estimate=cost,
    )(x, w_flat, b_flat)


# --------------------------- module wrapper ---------------------------

def _linear_init(key, fan_in, fan_out):
    # Mimics torch.nn.Linear default init: U(-1/sqrt(fan_in), 1/sqrt(fan_in)).
    kw, kb = jax.random.split(key)
    bound = 1.0 / jnp.sqrt(fan_in)
    w = jax.random.uniform(kw, (fan_in, fan_out), jnp.float32, -bound, bound)
    b = jax.random.uniform(kb, (fan_out,), jnp.float32, -bound, bound)
    return w, b


class ModelXtoCAuxPallas:
    def __init__(self, key, num_classes, n_attributes, bottleneck=False,
                 expand_dim=0, connect_CY=False, Lstm=False,
                 compute_dtype=jnp.bfloat16, block_n=2048, block_b=512):
        # TODO(synk): expand_dim > 0 adds an extra Linear+ReLU per FC head; only
        # the default expand_dim=0 path is implemented in the Pallas kernel.
        assert expand_dim == 0
        self.num_classes = num_classes
        self.n_attributes = n_attributes
        self.bottleneck = bottleneck
        self.connect_CY = connect_CY
        self.compute_dtype = compute_dtype
        self.block_b = block_b
        dim = 128 if Lstm else 768
        self.dim = dim

        if n_attributes > 0:
            n_fc = (0 if bottleneck else 1) + n_attributes
        else:
            n_fc = 1
        self.n_fc = n_fc

        keys = jax.random.split(key, n_fc + 1)
        ws, bs = [], []
        for i in range(n_fc):
            w, b = _linear_init(keys[i], dim, num_classes)
            ws.append(w)
            bs.append(b)
        self.w_stack = jnp.stack(ws, axis=0)          # (n_fc, dim, C)  (reference only)
        self.b_stack = jnp.stack(bs, axis=0)          # (n_fc, C)

        if connect_CY:
            self.w_cy, self.b_cy = _linear_init(keys[-1], n_attributes, num_classes)
        else:
            self.w_cy, self.b_cy = None, None

        # Fused weights: column f*C + c == head f, class c.
        C = num_classes
        N = n_fc * C
        w_flat = jnp.transpose(self.w_stack, (1, 0, 2)).reshape(dim, N)   # f32
        b_flat = self.b_stack.reshape(N)                                   # f32

        # torch only applies cy_fc when n_attributes > 0 and not bottleneck.
        self.use_cy = connect_CY and (n_attributes > 0) and (not bottleneck)
        if self.use_cy:
            # torch requires cat(out[1:]).shape[1] == n_attributes, i.e. num_classes == 1.
            assert num_classes == 1, "connect_CY path requires num_classes == 1"
            # Fold the linear residual into head 0 (exact up to fp reassociation):
            #   out[0] = x @ (w_0 + W_attr @ w_cy) + (b_0 + b_attr @ w_cy + b_cy)
            w_attr = w_flat[:, C:C + n_attributes * C]      # (dim, n_attributes)
            b_attr = b_flat[C:C + n_attributes * C]         # (n_attributes,)
            w_flat = w_flat.at[:, 0:C].add(w_attr @ self.w_cy)
            b_flat = b_flat.at[0:C].add(b_attr @ self.w_cy + self.b_cy)

        # Lane tiling: keep tn 256-aligned (full 2x256 MXU width) for any
        # non-trivial N; tiny models stay at one 128-lane tile.
        granule_n = 128 if N <= 128 else 256
        N_pad, tn = _tile_axis(N, block_n, granule_n)
        self.N, self.N_pad, self.tn = N, N_pad, tn

        w_flat_pad = jnp.pad(w_flat, ((0, 0), (0, N_pad - N)))
        self.b_flat_pad = jnp.pad(b_flat, (0, N_pad - N)).reshape(1, N_pad)
        # Cast weights to the compute dtype ONCE (no per-forward HBM round-trip).
        self.w_flat_kernel = w_flat_pad.astype(compute_dtype)

    def forward(self, x):
        B = x.shape[0]
        C = self.num_classes
        y = fused_heads(x, self.w_flat_kernel, self.b_flat_pad,
                        tn=self.tn, block_b=self.block_b)
        y = y[:B, :self.N]                             # crop sublane/lane padding
        return [y[:, f * C:(f + 1) * C] for f in range(self.n_fc)]

    # Plain-JAX reference (mirrors the torch forward op-for-op, in f32).
    def forward_ref(self, x):
        out = [x @ self.w_stack[i] + self.b_stack[i] for i in range(self.n_fc)]
        if self.n_attributes > 0 and (not self.bottleneck) and (self.w_cy is not None):
            attr_preds = jnp.concatenate(out[1:], axis=1)
            out[0] = out[0] + attr_preds @ self.w_cy + self.b_cy
        return out


# --------------------------------- main ---------------------------------

def _check(outs, refs, shape, atol, rtol):
    for o, r in zip(outs, refs):
        o = jax.block_until_ready(o)
        assert o.shape == shape, (o.shape, shape)
        assert jnp.allclose(o, r, atol=atol, rtol=rtol), float(jnp.max(jnp.abs(o - r)))


if __name__ == "__main__":
    key = jax.random.PRNGKey(0)
    k_x, k_m1, k_m2, k_m3, k_m4 = jax.random.split(key, 5)

    B, DIM = 2, 768
    x = jax.random.normal(k_x, (B, DIM), jnp.float32)

    # Config A: defaults (bottleneck=False, connect_CY=False), multi-class heads.
    #   A1: default bf16 compute (loose tolerance), A2: f32 compute (tight).
    model_a = ModelXtoCAuxPallas(k_m1, num_classes=5, n_attributes=4)
    _check(model_a.forward(x), model_a.forward_ref(x), (B, 5), 3e-2, 3e-2)
    assert len(model_a.forward(x)) == model_a.n_fc

    model_a32 = ModelXtoCAuxPallas(k_m1, num_classes=5, n_attributes=4,
                                   compute_dtype=jnp.float32)
    _check(model_a32.forward(x), model_a32.forward_ref(x), (B, 5), 1e-4, 1e-4)

    # Config B: connect_CY=True (num_classes == 1, as the torch code requires).
    #   Folded-weight residual; verify exactness of the fold in f32, and bf16 path.
    model_b32 = ModelXtoCAuxPallas(k_m2, num_classes=1, n_attributes=4,
                                   connect_CY=True, compute_dtype=jnp.float32)
    _check(model_b32.forward(x), model_b32.forward_ref(x), (B, 1), 1e-4, 1e-4)

    model_b = ModelXtoCAuxPallas(k_m2, num_classes=1, n_attributes=4, connect_CY=True)
    _check(model_b.forward(x), model_b.forward_ref(x), (B, 1), 3e-2, 3e-2)

    # Config C: bottleneck (X -> A only), Lstm dim=128.
    model_c = ModelXtoCAuxPallas(k_m3, num_classes=3, n_attributes=4,
                                 bottleneck=True, Lstm=True)
    x_lstm = jax.random.normal(k_x, (B, 128), jnp.float32)
    out_c = model_c.forward(x_lstm)
    assert len(out_c) == 4
    _check(out_c, model_c.forward_ref(x_lstm), (B, 3), 3e-2, 3e-2)

    # Config D: multi-tile grid coverage (2 N tiles x 3 batch tiles, f32, tight).
    model_d = ModelXtoCAuxPallas(k_m4, num_classes=7, n_attributes=40,
                                 compute_dtype=jnp.float32, block_n=256, block_b=16)
    x_d = jax.random.normal(k_x, (40, 768), jnp.float32)
    _check(model_d.forward(x_d), model_d.forward_ref(x_d), (40, 7), 1e-4, 1e-4)

    print("KERNEL_OK")
</pallas_src>

<mosaic_0001>
module attributes {stable_mosaic.version = 11 : i64} {
  func.func @_fused_heads_kernel(%arg0: i32, %arg1: i32, %arg2: memref<16x768xbf16, #tpu.memory_space<vmem>>, %arg3: memref<768x128xbf16, #tpu.memory_space<vmem>>, %arg4: memref<1x128xf32, #tpu.memory_space<vmem>>, %arg5: memref<16x128xf32, #tpu.memory_space<vmem>>) attributes {dimension_semantics = [#tpu.dimension_semantics<parallel>, #tpu.dimension_semantics<parallel>], iteration_bounds = array<i64: 1, 1>, scalar_prefetch = 0 : i64, scratch_operands = 0 : i64, tpu.core_type = #tpu.core_type<tc>, window_params = [{transform_indices = @transform_0, window_bounds = array<i64: 16, 768>}, {transform_indices = @transform_1, window_bounds = array<i64: 768, 128>}, {transform_indices = @transform_2, window_bounds = array<i64: 1, 128>}, {transform_indices = @transform_3, window_bounds = array<i64: 16, 128>}]} {
    %c0 = arith.constant 0 : index
    %c0_0 = arith.constant 0 : index
    %0 = vector.load %arg2[%c0, %c0_0] : memref<16x768xbf16, #tpu.memory_space<vmem>>, vector<16x768xbf16>
    %c0_1 = arith.constant 0 : index
    %c0_2 = arith.constant 0 : index
    %1 = vector.load %arg3[%c0_1, %c0_2] : memref<768x128xbf16, #tpu.memory_space<vmem>>, vector<768x128xbf16>
    %cst = arith.constant dense<0.000000e+00> : vector<16x128xf32>
    %2 = tpu.matmul %0, %1, %cst {dimension_numbers = #tpu.dot_dimension_numbers<[1], [0], [0], [1], [0, 0, 1, 1], [], []>} : vector<16x768xbf16>, vector<768x128xbf16>, vector<16x128xf32> -> vector<16x128xf32>
    %c0_3 = arith.constant 0 : index
    %c0_4 = arith.constant 0 : index
    %3 = vector.load %arg4[%c0_3, %c0_4] : memref<1x128xf32, #tpu.memory_space<vmem>>, vector<1x128xf32>
    %4 = vector.broadcast %3 : vector<1x128xf32> to vector<16x128xf32>
    %5 = arith.addf %2, %4 : vector<16x128xf32>
    %c0_5 = arith.constant 0 : index
    %c0_6 = arith.constant 0 : index
    %6 = vector.load %arg5[%c0_5, %c0_6] : memref<16x128xf32, #tpu.memory_space<vmem>>, vector<16x128xf32>
    tpu.vector_store %arg5[%c0_5, %c0_6], %5 {strides = array<i32>} : memref<16x128xf32, #tpu.memory_space<vmem>>, vector<16x128xf32>,
    return
  }
  func.func @transform_0(%arg0: i32, %arg1: i32) -> (i32, i32) {
    %c0_i32 = arith.constant 0 : i32
    %c0_i32_0 = arith.constant 0 : i32
    return %arg1, %c0_i32 : i32, i32
  }
  func.func @transform_1(%arg0: i32, %arg1: i32) -> (i32, i32) {
    %c0_i32 = arith.constant 0 : i32
    %c0_i32_0 = arith.constant 0 : i32
    return %c0_i32, %arg0 : i32, i32
  }
  func.func @transform_2(%arg0: i32, %arg1: i32) -> (i32, i32) {
    %c0_i32 = arith.constant 0 : i32
    %c0_i32_0 = arith.constant 0 : i32
    return %c0_i32, %arg0 : i32, i32
  }
  func.func @transform_3(%arg0: i32, %arg1: i32) -> (i32, i32) {
    %c0_i32 = arith.constant 0 : i32
    return %arg1, %arg0 : i32, i32
  }
}

</mosaic_0001>

<llo_original>
// kernel: tpu_custom_call.1
$region0: #{tpu_custom_call.1}
  #allocation0 [shape = 'u32[]', space=smem, size = 0x4, offset = 0x4, fixed_abs, tag = 'smem constant byte address 0x4 - core index']
  #allocation1 [shape = 'u32[144,128]{1,0:T(1,128)}', space=vmem, size = 0x12000, scoped, tag = 'internal scratch']
  %s0 = inlined_call_operand.hbm [shape: bf16[16,768], index: 0, kind: input, shape index: {}]
  %s1 = inlined_call_operand.hbm [shape: bf16[768,128], index: 1, kind: input, shape index: {}]
  %s2 = inlined_call_operand.vmem [shape: f32[1,128], index: 2, kind: input, shape index: {}]
  %s3 = inlined_call_operand.hbm [shape: f32[16,128], index: 3, kind: output, shape index: {}]
  %s4 = sld [smem:[#allocation0]]
  $region30: #{tpu_custom_call.1} parent=0
    _
  %s6 = ssub.s32 1, %s4
  %s7 = scalar_select 0, %s6, %s4
  $region1: #{tpu_custom_call.1} parent=0
    #allocation2 [shape = 'u8[24576]{0}', space=vmem, size = 0x6000, scoped, tag = 'input window, operand 0, single buffered']
    #allocation3 [shape = 's32[1]{0}', space=sflag, size = 0x4, scoped, tag = 'scoped memory for tpu_custom_call.1']
    #allocation4 [shape = 's32[1]{0}', space=sflag, size = 0x4, scoped, tag = 'scoped memory for tpu_custom_call.1']
    #allocation5 [shape = 'u8[196608]{0}', space=vmem, size = 0x30000, scoped, tag = 'input window, operand 1, single buffered']
    #allocation6 [shape = 's32[1]{0}', space=sflag, size = 0x4, scoped, tag = 'scoped memory for tpu_custom_call.1']
    #allocation7 [shape = 'u8[8192]{0}', space=vmem, size = 0x2000, scoped, tag = 'output window, operand 0, single buffered']
    %8 = vsyncpa [#allocation3], 0
    %9 = vsyncpa [#allocation6], 0
    %10 = vsyncpa [#allocation4], 0
    // Predicated region
    $region2: #{tpu_custom_call.1} parent=1 // pred_check
      _
    $region3: #{tpu_custom_call.1} parent=1 // pred_check_branch
      %12 = sbr.rel (0) target = $region5
    $region4: #{tpu_custom_call.1} parent=1 // pred_region
      %s14 = ssub.s32 768, 768
      %15 = vsyncadd [#allocation3], %s14
      %s16 = sshll.u32 [#allocation2], 4
      %s17 = int_to_ptr.vmem [resolvable:$true] %s16
      %22 = dma.hbm_to_vmem [thread:$0]  %s0, 768, %s17, [#allocation3], 384, 384, 24
    $region5: #{tpu_custom_call.1} parent=1 // pred_fallthru
      _
    // Predicated region
    $region6: #{tpu_custom_call.1} parent=1 // pred_check
      _
    $region7: #{tpu_custom_call.1} parent=1 // pred_check_branch
      %24 = sbr.rel (0) target = $region9
    $region8: #{tpu_custom_call.1} parent=1 // pred_region
      %s26 = ssub.s32 6144, 6144
      %27 = vsyncadd [#allocation6], %s26
      %s28 = sshll.u32 [#allocation5], 4
      %s29 = int_to_ptr.vmem [resolvable:$true] %s28
      %34 = dma.hbm_to_vmem [thread:$0]  %s1, 6144, %s29, [#allocation6], 64, 64, 4
    $region9: #{tpu_custom_call.1} parent=1 // pred_fallthru
      _
    // Predicated region
    $region10: #{tpu_custom_call.1} parent=1 // pred_check
      _
    $region11: #{tpu_custom_call.1} parent=1 // pred_check_branch
      %36 = sbr.rel (0) target = $region13
    $region12: #{tpu_custom_call.1} parent=1 // pred_region
      _
    $region13: #{tpu_custom_call.1} parent=1 // pred_fallthru
      _
    // Predicated region
    $region14: #{tpu_custom_call.1} parent=1 // pred_check
      _
    $region15: #{tpu_custom_call.1} parent=1 // pred_check_branch
      %38 = sbr.rel (0) target = $region17
    $region16: #{tpu_custom_call.1} parent=1 // pred_region
      %39 = dma.done [#allocation3], 768
    $region17: #{tpu_custom_call.1} parent=1 // pred_fallthru
      _
    // Predicated region
    $region18: #{tpu_custom_call.1} parent=1 // pred_check
      _
    $region19: #{tpu_custom_call.1} parent=1 // pred_check_branch
      %41 = sbr.rel (0) target = $region21
    $region20: #{tpu_custom_call.1} parent=1 // pred_region
      %42 = dma.done [#allocation6], 6144
    $region21: #{tpu_custom_call.1} parent=1 // pred_fallthru
      _
    %v44 = vld [vmem:[#allocation2] sm:$0xff]
    %v45 = vld [vmem:[#allocation2 + $0x8] sm:$0xff]
    %v46 = vld [vmem:[#allocation2 + $0x10] sm:$0xff]
    %v47 = vld [vmem:[#allocation2 + $0x18] sm:$0xff]
    %v48 = vld [vmem:[#allocation2 + $0x20] sm:$0xff]
    %v49 = vld [vmem:[#allocation2 + $0x28] sm:$0xff]
    %v50 = vld [vmem:[#allocation5] sm:$0xf]
    %v51 = vld [vmem:[#allocation5 + $0x4] sm:$0xf]
    %v52 = vld [vmem:[#allocation5 + $0x8] sm:$0xf]
    %v53 = vld [vmem:[#allocation5 + $0xc] sm:$0xf]
    %v54 = vld [vmem:[#allocation5 + $0x10] sm:$0xf]
    %v55 = vld [vmem:[#allocation5 + $0x14] sm:$0xf]
    %v56 = vld [vmem:[#allocation5 + $0x18] sm:$0xf]
    %v57 = vld [vmem:[#allocation5 + $0x1c] sm:$0xf]
    %v58 = vld [vmem:[#allocation5 + $0x20] sm:$0xf]
    %v59 = vld [vmem:[#allocation5 + $0x24] sm:$0xf]
    %v60 = vld [vmem:[#allocation5 + $0x28] sm:$0xf]
    %v61 = vld [vmem:[#allocation5 + $0x2c] sm:$0xf]
    %v62 = vld [vmem:[#allocation5 + $0x30] sm:$0xf]
    %v63 = vld [vmem:[#allocation5 + $0x34] sm:$0xf]
    %v64 = vld [vmem:[#allocation5 + $0x38] sm:$0xf]
    %v65 = vld [vmem:[#allocation5 + $0x3c] sm:$0xf]
    %v66 = vld [vmem:[#allocation5 + $0x40] sm:$0xf]
    %v67 = vld [vmem:[#allocation5 + $0x44] sm:$0xf]
    %v68 = vld [vmem:[#allocation5 + $0x48] sm:$0xf]
    %v69 = vld [vmem:[#allocation5 + $0x4c] sm:$0xf]
    %v70 = vld [vmem:[#allocation5 + $0x50] sm:$0xf]
    %v71 = vld [vmem:[#allocation5 + $0x54] sm:$0xf]
    %v72 = vld [vmem:[#allocation5 + $0x58] sm:$0xf]
    %v73 = vld [vmem:[#allocation5 + $0x5c] sm:$0xf]
    %v74 = vld [vmem:[#allocation5 + $0x60] sm:$0xf]
    %v75 = vld [vmem:[#allocation5 + $0x64] sm:$0xf]
    %v76 = vld [vmem:[#allocation5 + $0x68] sm:$0xf]
    %v77 = vld [vmem:[#allocation5 + $0x6c] sm:$0xf]
    %v78 = vld [vmem:[#allocation5 + $0x70] sm:$0xf]
    %v79 = vld [vmem:[#allocation5 + $0x74] sm:$0xf]
    %v80 = vld [vmem:[#allocation5 + $0x78] sm:$0xf]
    %v81 = vld [vmem:[#allocation5 + $0x7c] sm:$0xf]
    %v82 = vld [vmem:[#allocation5 + $0x80] sm:$0xf]
    %v83 = vld [vmem:[#allocation5 + $0x84] sm:$0xf]
    %v84 = vld [vmem:[#allocation5 + $0x88] sm:$0xf]
    %v85 = vld [vmem:[#allocation5 + $0x8c] sm:$0xf]
    %v86 = vld [vmem:[#allocation5 + $0x90] sm:$0xf]
    %v87 = vld [vmem:[#allocation5 + $0x94] sm:$0xf]
    %v88 = vld [vmem:[#allocation5 + $0x98] sm:$0xf]
    %v89 = vld [vmem:[#allocation5 + $0x9c] sm:$0xf]
    %v90 = vld [vmem:[#allocation5 + $0xa0] sm:$0xf]
    %v91 = vld [vmem:[#allocation5 + $0xa4] sm:$0xf]
    %v92 = vld [vmem:[#allocation5 + $0xa8] sm:$0xf]
    %v93 = vld [vmem:[#allocation5 + $0xac] sm:$0xf]
    %v94 = vld [vmem:[#allocation5 + $0xb0] sm:$0xf]
    %v95 = vld [vmem:[#allocation5 + $0xb4] sm:$0xf]
    %v96 = vld [vmem:[#allocation5 + $0xb8] sm:$0xf]
    %v97 = vld [vmem:[#allocation5 + $0xbc] sm:$0xf]
    %v98 = vld [vmem:[#allocation5 + $0xc0] sm:$0xf]
    %v99 = vld [vmem:[#allocation5 + $0xc4] sm:$0xf]
    %v100 = vld [vmem:[#allocation5 + $0xc8] sm:$0xf]
    %v101 = vld [vmem:[#allocation5 + $0xcc] sm:$0xf]
    %v102 = vld [vmem:[#allocation5 + $0xd0] sm:$0xf]
    %v103 = vld [vmem:[#allocation5 + $0xd4] sm:$0xf]
    %v104 = vld [vmem:[#allocation5 + $0xd8] sm:$0xf]
    %v105 = vld [vmem:[#allocation5 + $0xdc] sm:$0xf]
    %v106 = vld [vmem:[#allocation5 + $0xe0] sm:$0xf]
    %v107 = vld [vmem:[#allocation5 + $0xe4] sm:$0xf]
    %v108 = vld [vmem:[#allocation5 + $0xe8] sm:$0xf]
    %v109 = vld [vmem:[#allocation5 + $0xec] sm:$0xf]
    %v110 = vld [vmem:[#allocation5 + $0xf0] sm:$0xf]
    %v111 = vld [vmem:[#allocation5 + $0xf4] sm:$0xf]
    %v112 = vld [vmem:[#allocation5 + $0xf8] sm:$0xf]
    %v113 = vld [vmem:[#allocation5 + $0xfc] sm:$0xf]
    %v114 = vld [vmem:[#allocation5 + $0x100] sm:$0xf]
    %v115 = vld [vmem:[#allocation5 + $0x104] sm:$0xf]
    %v116 = vld [vmem:[#allocation5 + $0x108] sm:$0xf]
    %v117 = vld [vmem:[#allocation5 + $0x10c] sm:$0xf]
    %v118 = vld [vmem:[#allocation5 + $0x110] sm:$0xf]
    %v119 = vld [vmem:[#allocation5 + $0x114] sm:$0xf]
    %v120 = vld [vmem:[#allocation5 + $0x118] sm:$0xf]
    %v121 = vld [vmem:[#allocation5 + $0x11c] sm:$0xf]
    %v122 = vld [vmem:[#allocation5 + $0x120] sm:$0xf]
    %v123 = vld [vmem:[#allocation5 + $0x124] sm:$0xf]
    %v124 = vld [vmem:[#allocation5 + $0x128] sm:$0xf]
    %v125 = vld [vmem:[#allocation5 + $0x12c] sm:$0xf]
    %v126 = vld [vmem:[#allocation5 + $0x130] sm:$0xf]
    %v127 = vld [vmem:[#allocation5 + $0x134] sm:$0xf]
    %v128 = vld [vmem:[#allocation5 + $0x138] sm:$0xf]
    %v129 = vld [vmem:[#allocation5 + $0x13c] sm:$0xf]
    %v130 = vld [vmem:[#allocation5 + $0x140] sm:$0xf]
    %v131 = vld [vmem:[#allocation5 + $0x144] sm:$0xf]
    %v132 = vld [vmem:[#allocation5 + $0x148] sm:$0xf]
    %v133 = vld [vmem:[#allocation5 + $0x14c] sm:$0xf]
    %v134 = vld [vmem:[#allocation5 + $0x150] sm:$0xf]
    %v135 = vld [vmem:[#allocation5 + $0x154] sm:$0xf]
    %v136 = vld [vmem:[#allocation5 + $0x158] sm:$0xf]
    %v137 = vld [vmem:[#allocation5 + $0x15c] sm:$0xf]
    %v138 = vld [vmem:[#allocation5 + $0x160] sm:$0xf]
    %v139 = vld [vmem:[#allocation5 + $0x164] sm:$0xf]
    %v140 = vld [vmem:[#allocation5 + $0x168] sm:$0xf]
    %v141 = vld [vmem:[#allocation5 + $0x16c] sm:$0xf]
    %v142 = vld [vmem:[#allocation5 + $0x170] sm:$0xf]
    %v143 = vld [vmem:[#allocation5 + $0x174] sm:$0xf]
    %v144 = vld [vmem:[#allocation5 + $0x178] sm:$0xf]
    %v145 = vld [vmem:[#allocation5 + $0x17c] sm:$0xf]
    %v146 = vld [vmem:[%s2] sm:$0x1]
    %v148 = vlaneseq
    %v149 = vshrl.u32 %v148, 7
    %v150 = vsub.s32 0, %v149
    %v151 = vrot.slane %v146, %v150
    %v159 = vunpack.c.l.b16 %v44
    %v160 = vunpack.c.h.b16 %v44
    %v161 = vunpack.c.l.b16 %v45
    %v162 = vunpack.c.h.b16 %v45
    %v163 = vunpack.c.l.b16 %v46
    %v164 = vunpack.c.h.b16 %v46
    %v165 = vunpack.c.l.b16 %v47
    %v166 = vunpack.c.h.b16 %v47
    %v167 = vunpack.c.l.b16 %v48
    %v168 = vunpack.c.h.b16 %v48
    %v169 = vunpack.c.l.b16 %v49
    %v170 = vunpack.c.h.b16 %v49
    %v171 = vpack.c.b16 %v165, %v159
    %v172 = vpack.c.b16 %v166, %v160
    %v173 = vpack.c.b16 %v167, %v161
    %v174 = vpack.c.b16 %v168, %v162
    %v175 = vpack.c.b16 %v169, %v163
    %v176 = vpack.c.b16 %v170, %v164
    %v279 = vunpack.c.l.b16 %v50
    %v280 = vunpack.c.l.b16 %v51
    %v281 = vunpack.c.l.b16 %v52
    %v282 = vunpack.c.l.b16 %v53
    %v283 = vunpack.c.l.b16 %v54
    %v284 = vunpack.c.l.b16 %v55
    %v285 = vunpack.c.l.b16 %v56
    %v286 = vunpack.c.l.b16 %v57
    %v287 = vunpack.c.l.b16 %v58
    %v288 = vunpack.c.l.b16 %v59
    %v289 = vunpack.c.l.b16 %v60
    %v290 = vunpack.c.l.b16 %v61
    %v291 = vunpack.c.l.b16 %v62
    %v292 = vunpack.c.l.b16 %v63
    %v293 = vunpack.c.l.b16 %v64
    %v294 = vunpack.c.l.b16 %v65
    %v295 = vunpack.c.l.b16 %v66
    %v296 = vunpack.c.l.b16 %v67
    %v297 = vunpack.c.l.b16 %v68
    %v298 = vunpack.c.l.b16 %v69
    %v299 = vunpack.c.l.b16 %v70
    %v300 = vunpack.c.l.b16 %v71
    %v301 = vunpack.c.l.b16 %v72
    %v302 = vunpack.c.l.b16 %v73
    %v303 = vunpack.c.l.b16 %v74
    %v304 = vunpack.c.l.b16 %v75
    %v305 = vunpack.c.l.b16 %v76
    %v306 = vunpack.c.l.b16 %v77
    %v307 = vunpack.c.l.b16 %v78
    %v308 = vunpack.c.l.b16 %v79
    %v309 = vunpack.c.l.b16 %v80
    %v310 = vunpack.c.l.b16 %v81
    %v311 = vunpack.c.l.b16 %v82
    %v312 = vunpack.c.l.b16 %v83
    %v313 = vunpack.c.l.b16 %v84
    %v314 = vunpack.c.l.b16 %v85
    %v315 = vunpack.c.l.b16 %v86
    %v316 = vunpack.c.l.b16 %v87
    %v317 = vunpack.c.l.b16 %v88
    %v318 = vunpack.c.l.b16 %v89
    %v319 = vunpack.c.l.b16 %v90
    %v320 = vunpack.c.l.b16 %v91
    %v321 = vunpack.c.l.b16 %v92
    %v322 = vunpack.c.l.b16 %v93
    %v323 = vunpack.c.l.b16 %v94
    %v324 = vunpack.c.l.b16 %v95
    %v325 = vunpack.c.l.b16 %v96
    %v326 = vunpack.c.l.b16 %v97
    %v327 = vunpack.c.l.b16 %v98
    %v328 = vunpack.c.l.b16 %v99
    %v329 = vunpack.c.l.b16 %v100
    %v330 = vunpack.c.l.b16 %v101
    %v331 = vunpack.c.l.b16 %v102
    %v332 = vunpack.c.l.b16 %v103
    %v333 = vunpack.c.l.b16 %v104
    %v334 = vunpack.c.l.b16 %v105
    %v335 = vunpack.c.l.b16 %v106
    %v336 = vunpack.c.l.b16 %v107
    %v337 = vunpack.c.l.b16 %v108
    %v338 = vunpack.c.l.b16 %v109
    %v339 = vunpack.c.l.b16 %v110
    %v340 = vunpack.c.l.b16 %v111
    %v341 = vunpack.c.l.b16 %v112
    %v342 = vunpack.c.l.b16 %v113
    %v343 = vunpack.c.l.b16 %v114
    %v344 = vunpack.c.l.b16 %v115
    %v345 = vunpack.c.l.b16 %v116
    %v346 = vunpack.c.l.b16 %v117
    %v347 = vunpack.c.l.b16 %v118
    %v348 = vunpack.c.l.b16 %v119
    %v349 = vunpack.c.l.b16 %v120
    %v350 = vunpack.c.l.b16 %v121
    %v351 = vunpack.c.l.b16 %v122
    %v352 = vunpack.c.l.b16 %v123
    %v353 = vunpack.c.l.b16 %v124
    %v354 = vunpack.c.l.b16 %v125
    %v355 = vunpack.c.l.b16 %v126
    %v356 = vunpack.c.l.b16 %v127
    %v357 = vunpack.c.l.b16 %v128
    %v358 = vunpack.c.l.b16 %v129
    %v359 = vunpack.c.l.b16 %v130
    %v360 = vunpack.c.l.b16 %v131
    %v361 = vunpack.c.l.b16 %v132
    %v362 = vunpack.c.l.b16 %v133
    %v363 = vunpack.c.l.b16 %v134
    %v364 = vunpack.c.l.b16 %v135
    %v365 = vunpack.c.l.b16 %v136
    %v366 = vunpack.c.l.b16 %v137
    %v367 = vunpack.c.l.b16 %v138
    %v368 = vunpack.c.l.b16 %v139
    %v369 = vunpack.c.l.b16 %v140
    %v370 = vunpack.c.l.b16 %v141
    %v371 = vunpack.c.l.b16 %v142
    %v372 = vunpack.c.l.b16 %v143
    %v373 = vunpack.c.l.b16 %v144
    %v374 = vunpack.c.l.b16 %v145
    %v375 = vpack.c.b16 %v280, %v279
    %v376 = vpack.c.b16 %v282, %v281
    %v377 = vpack.c.b16 %v284, %v283
    %v378 = vpack.c.b16 %v286, %v285
    %v379 = vpack.c.b16 %v288, %v287
    %v380 = vpack.c.b16 %v290, %v289
    %v381 = vpack.c.b16 %v292, %v291
    %v382 = vpack.c.b16 %v294, %v293
    %v383 = vpack.c.b16 %v296, %v295
    %v384 = vpack.c.b16 %v298, %v297
    %v385 = vpack.c.b16 %v300, %v299
    %v386 = vpack.c.b16 %v302, %v301
    %v387 = vpack.c.b16 %v304, %v303
    %v388 = vpack.c.b16 %v306, %v305
    %v389 = vpack.c.b16 %v308, %v307
    %v390 = vpack.c.b16 %v310, %v309
    %v391 = vpack.c.b16 %v312, %v311
    %v392 = vpack.c.b16 %v314, %v313
    %v393 = vpack.c.b16 %v316, %v315
    %v394 = vpack.c.b16 %v318, %v317
    %v395 = vpack.c.b16 %v320, %v319
    %v396 = vpack.c.b16 %v322, %v321
    %v397 = vpack.c.b16 %v324, %v323
    %v398 = vpack.c.b16 %v326, %v325
    %v399 = vpack.c.b16 %v328, %v327
    %v400 = vpack.c.b16 %v330, %v329
    %v401 = vpack.c.b16 %v332, %v331
    %v402 = vpack.c.b16 %v334, %v333
    %v403 = vpack.c.b16 %v336, %v335
    %v404 = vpack.c.b16 %v338, %v337
    %v405 = vpack.c.b16 %v340, %v339
    %v406 = vpack.c.b16 %v342, %v341
    %v407 = vpack.c.b16 %v344, %v343
    %v408 = vpack.c.b16 %v346, %v345
    %v409 = vpack.c.b16 %v348, %v347
    %v410 = vpack.c.b16 %v350, %v349
    %v411 = vpack.c.b16 %v352, %v351
    %v412 = vpack.c.b16 %v354, %v353
    %v413 = vpack.c.b16 %v356, %v355
    %v414 = vpack.c.b16 %v358, %v357
    %v415 = vpack.c.b16 %v360, %v359
    %v416 = vpack.c.b16 %v362, %v361
    %v417 = vpack.c.b16 %v364, %v363
    %v418 = vpack.c.b16 %v366, %v365
    %v419 = vpack.c.b16 %v368, %v367
    %v420 = vpack.c.b16 %v370, %v369
    %v421 = vpack.c.b16 %v372, %v371
    %v422 = vpack.c.b16 %v374, %v373
    %471 = vmatprep.subr.bf16.mxu0 0
    %472 = vmatpush1.bf16.msra.mxu0 %v375
    %473 = vmatprep.subr.bf16.mxu0 0
    %474 = vmatpush1.bf16.msra.mxu0 %v376
    %475 = vmatprep.subr.bf16.mxu0 0
    %476 = vmatpush1.bf16.msra.mxu0 %v377
    %477 = vmatprep.subr.bf16.mxu0 0
    %478 = vmatpush1.bf16.msra.mxu0 %v378
    %479 = vmatprep.subr.bf16.mxu0 0
    %480 = vmatpush1.bf16.msra.mxu0 %v379
    %481 = vmatprep.subr.bf16.mxu0 0
    %482 = vmatpush1.bf16.msra.mxu0 %v380
    %483 = vmatprep.subr.bf16.mxu0 0
    %484 = vmatpush1.bf16.msra.mxu0 %v381
    %485 = vmatprep.subr.bf16.mxu0 0
    %486 = vmatpush1.bf16.msra.mxu0 %v382
    %487 = vmatprep.subr.bf16.mxu0 0
    %488 = vmatpush1.bf16.msra.mxu0 %v383
    %489 = vmatprep.subr.bf16.mxu0 0
    %490 = vmatpush1.bf16.msra.mxu0 %v384
    %491 = vmatprep.subr.bf16.mxu0 0
    %492 = vmatpush1.bf16.msra.mxu0 %v385
    %493 = vmatprep.subr.bf16.mxu0 0
    %494 = vmatpush1.bf16.msra.mxu0 %v386
    %495 = vmatprep.subr.bf16.mxu0 0
    %496 = vmatpush1.bf16.msra.mxu0 %v387
    %497 = vmatprep.subr.bf16.mxu0 0
    %498 = vmatpush1.bf16.msra.mxu0 %v388
    %499 = vmatprep.subr.bf16.mxu0 0
    %500 = vmatpush1.bf16.msra.mxu0 %v389
    %501 = vmatprep.subr.bf16.mxu0 0
    %502 = vmatpush1.bf16.msra.mxu0 %v390
    %503 = vmatprep.mubr.bf16.mxu0 %v172
    %504 = vmatmul.mubr.bf16.gmra.mrb[0].mxu0 %v171
    %v505 = vpop.f32.mrb[0].mxu0
    %v506 = vadd.f32 %v151, %v505
    %v507 = vpop.f32.mrb[0].mxu0
    %v508 = vpop.f32.mrb[0].mxu0
    %v509 = vadd.f32 %v151, %v508
    %v510 = vpop.f32.mrb[0].mxu0
    %511 = vdwg.mxu0
    %512 = vmatprep.subr.bf16.mxu0 0
    %513 = vmatpush1.bf16.msra.mxu0 %v391
    %514 = vmatprep.subr.bf16.mxu0 0
    %515 = vmatpush1.bf16.msra.mxu0 %v392
    %516 = vmatprep.subr.bf16.mxu0 0
    %517 = vmatpush1.bf16.msra.mxu0 %v393
    %518 = vmatprep.subr.bf16.mxu0 0
    %519 = vmatpush1.bf16.msra.mxu0 %v394
    %520 = vmatprep.subr.bf16.mxu0 0
    %521 = vmatpush1.bf16.msra.mxu0 %v395
    %522 = vmatprep.subr.bf16.mxu0 0
    %523 = vmatpush1.bf16.msra.mxu0 %v396
    %524 = vmatprep.subr.bf16.mxu0 0
    %525 = vmatpush1.bf16.msra.mxu0 %v397
    %526 = vmatprep.subr.bf16.mxu0 0
    %527 = vmatpush1.bf16.msra.mxu0 %v398
    %528 = vmatprep.subr.bf16.mxu0 0
    %529 = vmatpush1.bf16.msra.mxu0 %v399
    %530 = vmatprep.subr.bf16.mxu0 0
    %531 = vmatpush1.bf16.msra.mxu0 %v400
    %532 = vmatprep.subr.bf16.mxu0 0
    %533 = vmatpush1.bf16.msra.mxu0 %v401
    %534 = vmatprep.subr.bf16.mxu0 0
    %535 = vmatpush1.bf16.msra.mxu0 %v402
    %536 = vmatprep.subr.bf16.mxu0 0
    %537 = vmatpush1.bf16.msra.mxu0 %v403
    %538 = vmatprep.subr.bf16.mxu0 0
    %539 = vmatpush1.bf16.msra.mxu0 %v404
    %540 = vmatprep.subr.bf16.mxu0 0
    %541 = vmatpush1.bf16.msra.mxu0 %v405
    %542 = vmatprep.subr.bf16.mxu0 0
    %543 = vmatpush1.bf16.msra.mxu0 %v406
    %544 = vmatprep.mubr.bf16.mxu0 %v174
    %545 = vmatmul.mubr.bf16.gmra.mrb[0].mxu0 %v173
    %v546 = vpop.f32.mrb[0].mxu0
    %v547 = vadd.f32 %v506, %v546
    %v548 = vpop.f32.mrb[0].mxu0
    %v549 = vpop.f32.mrb[0].mxu0
    %v550 = vadd.f32 %v509, %v549
    %v551 = vpop.f32.mrb[0].mxu0
    %552 = vdwg.mxu0
    %553 = vmatprep.subr.bf16.mxu0 0
    %554 = vmatpush1.bf16.msra.mxu0 %v407
    %555 = vmatprep.subr.bf16.mxu0 0
    %556 = vmatpush1.bf16.msra.mxu0 %v408
    %557 = vmatprep.subr.bf16.mxu0 0
    %558 = vmatpush1.bf16.msra.mxu0 %v409
    %559 = vmatprep.subr.bf16.mxu0 0
    %560 = vmatpush1.bf16.msra.mxu0 %v410
    %561 = vmatprep.subr.bf16.mxu0 0
    %562 = vmatpush1.bf16.msra.mxu0 %v411
    %563 = vmatprep.subr.bf16.mxu0 0
    %564 = vmatpush1.bf16.msra.mxu0 %v412
    %565 = vmatprep.subr.bf16.mxu0 0
    %566 = vmatpush1.bf16.msra.mxu0 %v413
    %567 = vmatprep.subr.bf16.mxu0 0
    %568 = vmatpush1.bf16.msra.mxu0 %v414
    %569 = vmatprep.subr.bf16.mxu0 0
    %570 = vmatpush1.bf16.msra.mxu0 %v415
    %571 = vmatprep.subr.bf16.mxu0 0
    %572 = vmatpush1.bf16.msra.mxu0 %v416
    %573 = vmatprep.subr.bf16.mxu0 0
    %574 = vmatpush1.bf16.msra.mxu0 %v417
    %575 = vmatprep.subr.bf16.mxu0 0
    %576 = vmatpush1.bf16.msra.mxu0 %v418
    %577 = vmatprep.subr.bf16.mxu0 0
    %578 = vmatpush1.bf16.msra.mxu0 %v419
    %579 = vmatprep.subr.bf16.mxu0 0
    %580 = vmatpush1.bf16.msra.mxu0 %v420
    %581 = vmatprep.subr.bf16.mxu0 0
    %582 = vmatpush1.bf16.msra.mxu0 %v421
    %583 = vmatprep.subr.bf16.mxu0 0
    %584 = vmatpush1.bf16.msra.mxu0 %v422
    %585 = vmatprep.mubr.bf16.mxu0 %v176
    %586 = vmatmul.mubr.bf16.gmra.mrb[0].mxu0 %v175
    %v587 = vpop.f32.mrb[0].mxu0
    %v588 = vadd.f32 %v547, %v587
    %v589 = vpop.f32.mrb[0].mxu0
    %v590 = vpop.f32.mrb[0].mxu0
    %v591 = vadd.f32 %v550, %v590
    %v592 = vpop.f32.mrb[0].mxu0
    %593 = vdwg.mxu0
    %594 = vst [vmem:[#allocation7] sm:$0xff] %v588
    %595 = vst [vmem:[#allocation7 + $0x8] sm:$0xff] %v591
    // Predicated region
    $region22: #{tpu_custom_call.1} parent=1 // pred_check
      _
    $region23: #{tpu_custom_call.1} parent=1 // pred_check_branch
      %597 = sbr.rel (0) target = $region25
    $region24: #{tpu_custom_call.1} parent=1 // pred_region
      %s599 = ssub.s32 256, 256
      %600 = vsyncadd [#allocation4], %s599
      %s601 = sshll.u32 [#allocation7], 4
      %s602 = int_to_ptr.vmem [resolvable:$true] %s601
      %607 = dma.vmem_to_hbm [thread:$0]  %s602, 256, %s3, [#allocation4], 128, 128, 8
    $region25: #{tpu_custom_call.1} parent=1 // pred_fallthru
      _
    // Predicated region
    $region26: #{tpu_custom_call.1} parent=1 // pred_check
      _
    $region27: #{tpu_custom_call.1} parent=1 // pred_check_branch
      %609 = sbr.rel (0) target = $region29
    $region28: #{tpu_custom_call.1} parent=1 // pred_region
      %610 = dma.done [#allocation4], 256
    $region29: #{tpu_custom_call.1} parent=1 // pred_fallthru
      _
    %611 = vsyncpa [#allocation3], 1
    %612 = vsyncpa [#allocation6], 1
    %613 = vsyncpa [#allocation4], 1

</llo_original>
